<compile_context>
chip_gen: v5e
topology: v5e:2x2
jax: 0.10.0
libtpu: 0.0.40
codegen_flags: <defaults>
</compile_context>

<pallas_src>
import numpy as np
import jax
import jax.numpy as jnp
from jax.experimental import pallas as pl
from jax.experimental.pallas import tpu as pltpu

NUM_CLASSES = 14

# Deterministic parameters: the exact class weights the module hard-codes (compile-time consts).
CE_CLASS_WEIGHTS = (1.0, 3.522, 6.1049, 4.6267, 20.8959, 29.9953,
                    1.0, 3.1058, 9.3213, 8.8012, 13.2363, 11.6498, 1.0, 1.0)

# Upper bound on pixels per grid step (multiple of 128 lanes).  ~2 MiB of f32 logits/tile.
MAX_TILE_PIXELS = 32 * 1024


def _round_up(v, m):
    return (v + m - 1) // m * m


def _choose_tile(hws):
    """Tile size: big enough to amortize per-step overhead, small enough that padding
    each head to a tile multiple stays a small fraction of total HBM traffic."""
    total = sum(hws)
    num_heads = len(hws)
    cap = _round_up(max(1, total // max(1, 2 * num_heads)), 128)
    tile = min(MAX_TILE_PIXELS, cap, _round_up(max(hws), 128))
    return max(128, tile)


def _wce_tile_kernel(logits_ref, labels_ref, out_ref):
    """Per-tile class-weighted NLL partial sums.

    logits_ref: (1, C, TILE)   pixels on lanes, classes on sublanes.
    labels_ref: (1, 1, TILE)   int32; out-of-range labels (padding) get weight 0.
    out_ref:    (1, 1, 8, 128) f32; sublane 0 = sum(w * nll), sublane 1 = sum(w).
    """
    C = NUM_CLASSES
    logits = logits_ref[0].astype(jnp.float32)            # (C, TILE)
    labels = labels_ref[0]                                 # (1, TILE)
    tile = logits.shape[1]

    # Numerically stable log-softmax along the class (sublane) axis.
    m = jnp.max(logits, axis=0, keepdims=True)             # (1, TILE)
    z = logits - m
    lse = jnp.log(jnp.sum(jnp.exp(z), axis=0, keepdims=True))

    # One-hot over classes, reused for BOTH the target-logit gather and the
    # class-weight gather (replaces the 14-way tile-wide where-chain).
    cls = jax.lax.broadcasted_iota(jnp.int32, (C, tile), 0)
    onehot = cls == labels                                  # (C, TILE)

    # (C, 1) per-class weight column from compile-time constants (single vreg; ~free).
    col = jax.lax.broadcasted_iota(jnp.int32, (C, 1), 0)
    wcol = jnp.zeros((C, 1), jnp.float32)
    for c, wc in enumerate(CE_CLASS_WEIGHTS):
        wcol = jnp.where(col == c, jnp.float32(wc), wcol)

    z_y = jnp.sum(jnp.where(onehot, z, 0.0), axis=0, keepdims=True)    # (1, TILE)
    w = jnp.sum(jnp.where(onehot, wcol, 0.0), axis=0, keepdims=True)   # (1, TILE); pad -> 0

    nll = lse - z_y                                         # finite even on padded lanes
    num = jnp.sum(w * nll)                                  # per-tile scalar (XLU reduce)
    den = jnp.sum(w)

    # Lane-dense, full-(8,128)-tile unmasked store.
    subl = jax.lax.broadcasted_iota(jnp.int32, (1, 1, 8, 128), 2)
    out_ref[...] = jnp.where(subl == 0, num, jnp.where(subl == 1, den, 0.0))


def _fused_weighted_ce_means(xs, ys):
    """One pallas_call over all deep-supervision heads -> per-head weighted-CE means."""
    num_heads = len(xs)
    N = xs[0].shape[0]
    C = NUM_CLASSES

    hws = []
    for x in xs:
        assert x.shape[0] == N and x.shape[1] == C
        hws.append(int(np.prod(x.shape[2:])))

    tile = _choose_tile(hws)
    nblks = [(hw + tile - 1) // tile for hw in hws]
    T = int(sum(nblks))

    # Concatenate every head along the pixel (lane) axis, padded to a tile multiple.
    # Padded labels = NUM_CLASSES -> class weight 0 -> no contribution to num or den.
    logit_parts, label_parts = [], []
    for x, y, hw, nb in zip(xs, ys, hws, nblks):
        xl = x.reshape(N, C, hw)
        yl = y.reshape(N, 1, hw).astype(jnp.int32)
        pad = nb * tile - hw
        if pad:
            xl = jnp.pad(xl, ((0, 0), (0, 0), (0, pad)))
            yl = jnp.pad(yl, ((0, 0), (0, 0), (0, pad)), constant_values=NUM_CLASSES)
        logit_parts.append(xl)
        label_parts.append(yl)
    logits_cat = jnp.concatenate(logit_parts, axis=2) if num_heads > 1 else logit_parts[0]
    labels_cat = jnp.concatenate(label_parts, axis=2) if num_heads > 1 else label_parts[0]

    # Scoped-VMEM limit from the actual double-buffered footprint (+ slack), not a fixed 32 MiB.
    lsz = logits_cat.dtype.itemsize
    sub = 8 * max(1, 4 // lsz)                      # sublane packing for the logits dtype
    logits_blk = _round_up(C, sub) * tile * lsz
    labels_blk = 8 * tile * 4
    out_blk = 8 * 128 * 4
    vmem_bytes = 2 * (logits_blk + labels_blk + out_blk) + (4 << 20)
    vmem_bytes = int(min(max(vmem_bytes, 16 << 20), 64 << 20))

    out = pl.pallas_call(
        _wce_tile_kernel,
        out_shape=jax.ShapeDtypeStruct((N, T, 8, 128), jnp.float32),
        grid=(N, T),
        in_specs=[pl.BlockSpec((1, C, tile), lambda n, t: (n, 0, t)),
                  pl.BlockSpec((1, 1, tile), lambda n, t: (n, 0, t))],
        out_specs=pl.BlockSpec((1, 1, 8, 128), lambda n, t: (n, t, 0, 0)),
        compiler_params=pltpu.CompilerParams(
            dimension_semantics=("parallel", "parallel"),
            vmem_limit_bytes=vmem_bytes,
        ),
    )(logits_cat, labels_cat)

    nums = jnp.sum(out[:, :, 0, 0], axis=0)   # (T,) per-tile weighted-NLL sums
    dens = jnp.sum(out[:, :, 1, 0], axis=0)   # (T,) per-tile weight sums

    per_head = []
    off = 0
    for nb in nblks:
        per_head.append(jnp.sum(nums[off:off + nb]) / jnp.sum(dens[off:off + nb]))
        off += nb
    return jnp.stack(per_head)                 # per-head class-weighted CE (mean reduction)


def multiple_output_loss2(xs, ys, weight_factors=None):
    """Forward of MultipleOutputLoss2: weighted sum of per-scale class-weighted CE losses."""
    assert isinstance(xs, (tuple, list)), 'x must be either tuple or list'
    assert isinstance(ys, (tuple, list)), 'y must be either tuple or list'
    assert len(xs) == len(ys)
    weights = [1] * len(xs) if weight_factors is None else weight_factors

    per_head = _fused_weighted_ce_means(list(xs), list(ys))

    l = weights[0] * per_head[0]
    for i in range(1, len(xs)):
        if weights[i] != 0:
            l = l + weights[i] * per_head[i]
    return l


def _ref_loss(logits_nchw, labels_nhw, cw):
    """Pure-JAX reference: nn.CrossEntropyLoss(weight=cw) with mean reduction."""
    N, C, H, W = logits_nchw.shape
    logits = jnp.transpose(logits_nchw, (0, 2, 3, 1)).reshape(-1, C)
    labels = labels_nhw.reshape(-1)
    logp = jax.nn.log_softmax(logits, axis=-1)
    nll = -jnp.take_along_axis(logp, labels[:, None], axis=-1)[:, 0]
    w = cw[labels]
    return jnp.sum(w * nll) / jnp.sum(w)


if __name__ == "__main__":
    key = jax.random.PRNGKey(0)
    # Deep-supervision pyramid: 3 heads at decreasing spatial resolution.
    shapes = [(2, NUM_CLASSES, 16, 16),
              (2, NUM_CLASSES, 8, 8),
              (2, NUM_CLASSES, 4, 4)]
    xs, ys = [], []
    for s in shapes:
        key, k1, k2 = jax.random.split(key, 3)
        xs.append(jax.random.normal(k1, s, dtype=jnp.float32))
        ys.append(jax.random.randint(k2, (s[0], s[2], s[3]), 0, NUM_CLASSES,
                                     dtype=jnp.int32))

    out = multiple_output_loss2(xs, ys)
    out = jax.block_until_ready(out)

    cw = jnp.asarray(CE_CLASS_WEIGHTS, dtype=jnp.float32)
    ref = sum(_ref_loss(x, y, cw) for x, y in zip(xs, ys))
    ref = jax.block_until_ready(ref)
    assert np.allclose(np.asarray(out), np.asarray(ref), rtol=1e-4, atol=1e-4), (
        float(out), float(ref))

    print("KERNEL_OK")
</pallas_src>

<mosaic_0001>
module attributes {stable_mosaic.version = 11 : i64} {
  func.func @_wce_tile_kernel(%arg0: i32, %arg1: i32, %arg2: memref<1x14x128xf32, #tpu.memory_space<vmem>>, %arg3: memref<1x1x128xi32, #tpu.memory_space<vmem>>, %arg4: memref<1x1x8x128xf32, #tpu.memory_space<vmem>>) attributes {dimension_semantics = [#tpu.dimension_semantics<parallel>, #tpu.dimension_semantics<parallel>], iteration_bounds = array<i64: 2, 4>, scalar_prefetch = 0 : i64, scratch_operands = 0 : i64, tpu.core_type = #tpu.core_type<tc>, window_params = [{transform_indices = @transform_0, window_bounds = array<i64: 1, 14, 128>}, {transform_indices = @transform_1, window_bounds = array<i64: 1, 1, 128>}, {transform_indices = @transform_2, window_bounds = array<i64: 1, 1, 8, 128>}]} {
    %c0 = arith.constant 0 : index
    %c0_0 = arith.constant 0 : index
    %c0_1 = arith.constant 0 : index
    %0 = vector.load %arg2[%c0, %c0_0, %c0_1] : memref<1x14x128xf32, #tpu.memory_space<vmem>>, vector<1x14x128xf32>
    %1 = vector.shape_cast %0 : vector<1x14x128xf32> to vector<14x128xf32>
    %c0_2 = arith.constant 0 : index
    %c0_3 = arith.constant 0 : index
    %c0_4 = arith.constant 0 : index
    %2 = vector.load %arg3[%c0_2, %c0_3, %c0_4] : memref<1x1x128xi32, #tpu.memory_space<vmem>>, vector<1x1x128xi32>
    %3 = vector.shape_cast %2 : vector<1x1x128xi32> to vector<1x128xi32>
    %cst = arith.constant dense<0xFF800000> : vector<128xf32>
    %4 = vector.multi_reduction <maximumf>, %1, %cst [0] : vector<14x128xf32> to vector<128xf32>
    %5 = vector.shape_cast %4 : vector<128xf32> to vector<1x128xf32>
    %6 = vector.broadcast %5 : vector<1x128xf32> to vector<14x128xf32>
    %7 = arith.subf %1, %6 : vector<14x128xf32>
    %8 = math.exp %7 : vector<14x128xf32>
    %cst_5 = arith.constant dense<0.000000e+00> : vector<128xf32>
    %9 = vector.multi_reduction <add>, %8, %cst_5 [0] : vector<14x128xf32> to vector<128xf32>
    %10 = vector.shape_cast %9 : vector<128xf32> to vector<1x128xf32>
    %11 = math.log %10 : vector<1x128xf32>
    %12 = tpu.iota {dimensions = array<i32: 0>} : vector<14x128xi32>
    %13 = vector.broadcast %3 : vector<1x128xi32> to vector<14x128xi32>
    %14 = arith.cmpi eq, %12, %13 : vector<14x128xi32>
    %15 = tpu.iota {dimensions = array<i32: 0>} : vector<14x1xi32>
    %cst_6 = arith.constant 0.000000e+00 : f32
    %16 = vector.broadcast %cst_6 : f32 to vector<14x1xf32>
    %c0_i32 = arith.constant 0 : i32
    %17 = vector.broadcast %c0_i32 : i32 to vector<14x1xi32>
    %18 = arith.cmpi eq, %15, %17 : vector<14x1xi32>
    %cst_7 = arith.constant 1.000000e+00 : f32
    %19 = vector.broadcast %cst_7 : f32 to vector<14x1xf32>
    %20 = arith.select %18, %19, %16 : vector<14x1xi1>, vector<14x1xf32>
    %c1_i32 = arith.constant 1 : i32
    %21 = vector.broadcast %c1_i32 : i32 to vector<14x1xi32>
    %22 = arith.cmpi eq, %15, %21 : vector<14x1xi32>
    %cst_8 = arith.constant 3.522000e+00 : f32
    %23 = vector.broadcast %cst_8 : f32 to vector<14x1xf32>
    %24 = arith.select %22, %23, %20 : vector<14x1xi1>, vector<14x1xf32>
    %c2_i32 = arith.constant 2 : i32
    %25 = vector.broadcast %c2_i32 : i32 to vector<14x1xi32>
    %26 = arith.cmpi eq, %15, %25 : vector<14x1xi32>
    %cst_9 = arith.constant 6.104900e+00 : f32
    %27 = vector.broadcast %cst_9 : f32 to vector<14x1xf32>
    %28 = arith.select %26, %27, %24 : vector<14x1xi1>, vector<14x1xf32>
    %c3_i32 = arith.constant 3 : i32
    %29 = vector.broadcast %c3_i32 : i32 to vector<14x1xi32>
    %30 = arith.cmpi eq, %15, %29 : vector<14x1xi32>
    %cst_10 = arith.constant 4.626700e+00 : f32
    %31 = vector.broadcast %cst_10 : f32 to vector<14x1xf32>
    %32 = arith.select %30, %31, %28 : vector<14x1xi1>, vector<14x1xf32>
    %c4_i32 = arith.constant 4 : i32
    %33 = vector.broadcast %c4_i32 : i32 to vector<14x1xi32>
    %34 = arith.cmpi eq, %15, %33 : vector<14x1xi32>
    %cst_11 = arith.constant 2.089590e+01 : f32
    %35 = vector.broadcast %cst_11 : f32 to vector<14x1xf32>
    %36 = arith.select %34, %35, %32 : vector<14x1xi1>, vector<14x1xf32>
    %c5_i32 = arith.constant 5 : i32
    %37 = vector.broadcast %c5_i32 : i32 to vector<14x1xi32>
    %38 = arith.cmpi eq, %15, %37 : vector<14x1xi32>
    %cst_12 = arith.constant 2.999530e+01 : f32
    %39 = vector.broadcast %cst_12 : f32 to vector<14x1xf32>
    %40 = arith.select %38, %39, %36 : vector<14x1xi1>, vector<14x1xf32>
    %c6_i32 = arith.constant 6 : i32
    %41 = vector.broadcast %c6_i32 : i32 to vector<14x1xi32>
    %42 = arith.cmpi eq, %15, %41 : vector<14x1xi32>
    %cst_13 = arith.constant 1.000000e+00 : f32
    %43 = vector.broadcast %cst_13 : f32 to vector<14x1xf32>
    %44 = arith.select %42, %43, %40 : vector<14x1xi1>, vector<14x1xf32>
    %c7_i32 = arith.constant 7 : i32
    %45 = vector.broadcast %c7_i32 : i32 to vector<14x1xi32>
    %46 = arith.cmpi eq, %15, %45 : vector<14x1xi32>
    %cst_14 = arith.constant 3.105800e+00 : f32
    %47 = vector.broadcast %cst_14 : f32 to vector<14x1xf32>
    %48 = arith.select %46, %47, %44 : vector<14x1xi1>, vector<14x1xf32>
    %c8_i32 = arith.constant 8 : i32
    %49 = vector.broadcast %c8_i32 : i32 to vector<14x1xi32>
    %50 = arith.cmpi eq, %15, %49 : vector<14x1xi32>
    %cst_15 = arith.constant 9.32129955 : f32
    %51 = vector.broadcast %cst_15 : f32 to vector<14x1xf32>
    %52 = arith.select %50, %51, %48 : vector<14x1xi1>, vector<14x1xf32>
    %c9_i32 = arith.constant 9 : i32
    %53 = vector.broadcast %c9_i32 : i32 to vector<14x1xi32>
    %54 = arith.cmpi eq, %15, %53 : vector<14x1xi32>
    %cst_16 = arith.constant 8.80119991 : f32
    %55 = vector.broadcast %cst_16 : f32 to vector<14x1xf32>
    %56 = arith.select %54, %55, %52 : vector<14x1xi1>, vector<14x1xf32>
    %c10_i32 = arith.constant 10 : i32
    %57 = vector.broadcast %c10_i32 : i32 to vector<14x1xi32>
    %58 = arith.cmpi eq, %15, %57 : vector<14x1xi32>
    %cst_17 = arith.constant 1.323630e+01 : f32
    %59 = vector.broadcast %cst_17 : f32 to vector<14x1xf32>
    %60 = arith.select %58, %59, %56 : vector<14x1xi1>, vector<14x1xf32>
    %c11_i32 = arith.constant 11 : i32
    %61 = vector.broadcast %c11_i32 : i32 to vector<14x1xi32>
    %62 = arith.cmpi eq, %15, %61 : vector<14x1xi32>
    %cst_18 = arith.constant 1.164980e+01 : f32
    %63 = vector.broadcast %cst_18 : f32 to vector<14x1xf32>
    %64 = arith.select %62, %63, %60 : vector<14x1xi1>, vector<14x1xf32>
    %c12_i32 = arith.constant 12 : i32
    %65 = vector.broadcast %c12_i32 : i32 to vector<14x1xi32>
    %66 = arith.cmpi eq, %15, %65 : vector<14x1xi32>
    %cst_19 = arith.constant 1.000000e+00 : f32
    %67 = vector.broadcast %cst_19 : f32 to vector<14x1xf32>
    %68 = arith.select %66, %67, %64 : vector<14x1xi1>, vector<14x1xf32>
    %c13_i32 = arith.constant 13 : i32
    %69 = vector.broadcast %c13_i32 : i32 to vector<14x1xi32>
    %70 = arith.cmpi eq, %15, %69 : vector<14x1xi32>
    %cst_20 = arith.constant 1.000000e+00 : f32
    %71 = vector.broadcast %cst_20 : f32 to vector<14x1xf32>
    %72 = arith.select %70, %71, %68 : vector<14x1xi1>, vector<14x1xf32>
    %cst_21 = arith.constant 0.000000e+00 : f32
    %73 = vector.broadcast %cst_21 : f32 to vector<14x128xf32>
    %74 = arith.select %14, %7, %73 : vector<14x128xi1>, vector<14x128xf32>
    %cst_22 = arith.constant dense<0.000000e+00> : vector<128xf32>
    %75 = vector.multi_reduction <add>, %74, %cst_22 [0] : vector<14x128xf32> to vector<128xf32>
    %76 = vector.shape_cast %75 : vector<128xf32> to vector<1x128xf32>
    %cst_23 = arith.constant 0.000000e+00 : f32
    %77 = vector.shape_cast %72 : vector<14x1xf32> to vector<14x1xf32>
    %78 = vector.broadcast %77 : vector<14x1xf32> to vector<14x128xf32>
    %79 = vector.broadcast %cst_23 : f32 to vector<14x128xf32>
    %80 = arith.select %14, %78, %79 : vector<14x128xi1>, vector<14x128xf32>
    %cst_24 = arith.constant dense<0.000000e+00> : vector<128xf32>
    %81 = vector.multi_reduction <add>, %80, %cst_24 [0] : vector<14x128xf32> to vector<128xf32>
    %82 = vector.shape_cast %81 : vector<128xf32> to vector<1x128xf32>
    %83 = arith.subf %11, %76 : vector<1x128xf32>
    %84 = arith.mulf %82, %83 : vector<1x128xf32>
    %85 = vector.shape_cast %84 : vector<1x128xf32> to vector<1x1x128xf32>
    %cst_25 = arith.constant dense<0.000000e+00> : vector<1xf32>
    %86 = vector.multi_reduction <add>, %85, %cst_25 [1, 2] : vector<1x1x128xf32> to vector<1xf32>
    %87 = vector.shape_cast %86 : vector<1xf32> to vector<1x1x1xf32>
    %88 = vector.extract %87[0, 0, 0] : f32 from vector<1x1x1xf32>
    %89 = vector.shape_cast %82 : vector<1x128xf32> to vector<1x1x128xf32>
    %cst_26 = arith.constant dense<0.000000e+00> : vector<1xf32>
    %90 = vector.multi_reduction <add>, %89, %cst_26 [1, 2] : vector<1x1x128xf32> to vector<1xf32>
    %91 = vector.shape_cast %90 : vector<1xf32> to vector<1x1x1xf32>
    %92 = vector.extract %91[0, 0, 0] : f32 from vector<1x1x1xf32>
    %93 = tpu.iota {dimensions = array<i32: 2>} : vector<1x1x8x128xi32>
    %c0_i32_27 = arith.constant 0 : i32
    %94 = vector.broadcast %c0_i32_27 : i32 to vector<1x1x8x128xi32>
    %95 = arith.cmpi eq, %93, %94 : vector<1x1x8x128xi32>
    %c1_i32_28 = arith.constant 1 : i32
    %96 = vector.broadcast %c1_i32_28 : i32 to vector<1x1x8x128xi32>
    %97 = arith.cmpi eq, %93, %96 : vector<1x1x8x128xi32>
    %cst_29 = arith.constant 0.000000e+00 : f32
    %98 = vector.broadcast %92 : f32 to vector<1x1x8x128xf32>
    %99 = vector.broadcast %cst_29 : f32 to vector<1x1x8x128xf32>
    %100 = arith.select %97, %98, %99 : vector<1x1x8x128xi1>, vector<1x1x8x128xf32>
    %101 = vector.broadcast %88 : f32 to vector<1x1x8x128xf32>
    %102 = arith.select %95, %101, %100 : vector<1x1x8x128xi1>, vector<1x1x8x128xf32>
    %c0_30 = arith.constant 0 : index
    %c0_31 = arith.constant 0 : index
    %c0_32 = arith.constant 0 : index
    %c0_33 = arith.constant 0 : index
    %103 = vector.load %arg4[%c0_30, %c0_31, %c0_32, %c0_33] : memref<1x1x8x128xf32, #tpu.memory_space<vmem>>, vector<1x1x8x128xf32>
    tpu.vector_store %arg4[%c0_30, %c0_31, %c0_32, %c0_33], %102 {strides = array<i32>} : memref<1x1x8x128xf32, #tpu.memory_space<vmem>>, vector<1x1x8x128xf32>,
    return
  }
  func.func @transform_0(%arg0: i32, %arg1: i32) -> (i32, i32, i32) {
    %c0_i32 = arith.constant 0 : i32
    %c0_i32_0 = arith.constant 0 : i32
    return %arg0, %c0_i32, %arg1 : i32, i32, i32
  }
  func.func @transform_1(%arg0: i32, %arg1: i32) -> (i32, i32, i32) {
    %c0_i32 = arith.constant 0 : i32
    %c0_i32_0 = arith.constant 0 : i32
    return %arg0, %c0_i32, %arg1 : i32, i32, i32
  }
  func.func @transform_2(%arg0: i32, %arg1: i32) -> (i32, i32, i32, i32) {
    %c0_i32 = arith.constant 0 : i32
    %c0_i32_0 = arith.constant 0 : i32
    %c0_i32_1 = arith.constant 0 : i32
    return %arg0, %arg1, %c0_i32, %c0_i32_0 : i32, i32, i32, i32
  }
}

</mosaic_0001>

<llo_original>
// kernel: tpu_custom_call.1
$region0: #{tpu_custom_call.1}
  #allocation0 [shape = 'u32[]', space=smem, size = 0x4, offset = 0x4, fixed_abs, tag = 'smem constant byte address 0x4 - core index']
  #allocation1 [shape = 'u32[72,128]{1,0:T(1,128)}', space=vmem, size = 0x9000, scoped, tag = 'internal scratch']
  %s0 = inlined_call_operand.vmem [shape: f32[2,14,512], index: 0, kind: input, shape index: {}]
  %s1 = inlined_call_operand.vmem [shape: s32[2,1,512], index: 1, kind: input, shape index: {}]
  %s2 = inlined_call_operand.hbm [shape: f32[2,4,8,128], index: 2, kind: output, shape index: {}]
  %s3 = sld [smem:[#allocation0]]
  $region79: #{tpu_custom_call.1} parent=0
    _
  %s5 = ssub.s32 1, %s3
  %s6 = scalar_select 0, %s5, %s3
  $region1: #{tpu_custom_call.1} parent=0
    #allocation2 [shape = 'u8[16384]{0}', space=vmem, size = 0x4000, scoped, tag = 'input window, operand 0']
    #allocation3 [shape = 'u8[8192]{0}', space=vmem, size = 0x2000, scoped, tag = 'output window, operand 0']
    #allocation4 [shape = 's32[2]{0}', space=sflag, size = 0x8, scoped, tag = 'scoped memory for tpu_custom_call.1']
    %7 = vsyncpa [#allocation4], 0
    %s8 = scalar_lea.sflag [#allocation4], 1
    %9 = vsyncpa %s8, 0
    loop: start=0, step=1, limit=10
    $region2: #{tpu_custom_call.1} parent=1 // loop_pre_header
      _
    $region3: #{tpu_custom_call.1} parent=1 // loop_header
      %s11 = sphi 0, %s15
      %p12 = scmp.ge.s32.totalorder %s11, 10
      %s18 = sphi 0, %s30
      %s19 = sphi 0, %s26
      %s20 = sphi 0, %s18
      %s21 = sphi 0, %s19
      %s22 = sphi 0, %s20
      %s23 = sphi 0, %s21
      %s35 = sphi 0, %s37
      %s38 = sphi 0, %s35
      %s39 = sphi 0, %s38
      %s55 = sphi 0, %s39
      %s63 = sphi 0, %s65
      %s66 = sphi 0, %s63
      %s67 = sphi 0, %s66
      %s83 = sphi 0, %s67
      %s91 = sphi 0, %s93
      %s94 = sphi 0, %s91
      %s95 = sphi 0, %s94
      %s111 = sphi 0, %s95
    $region4: #{tpu_custom_call.1} parent=1 // loop_header_branch
      %14 = sbr.rel (%p12) target = $region8
    $region5: #{tpu_custom_call.1} parent=1 // loop_body
      %s16 = ssub.s32 %s11, 1
      %s17 = ssub.s32 %s11, 2
      %s24 = sadd.s32 1, %s19
      %p25 = scmp.ge.s32.totalorder %s24, 4
      %s26 = scalar_select %p25, 0, %s24
      %s27 = sadd.s32 1, %s18
      %s28 = scalar_select %p25, %s27, %s18
      %p29 = scmp.ge.s32.totalorder %s28, 2
      %s30 = scalar_select %p29, 0, %s28
      %s31 = ssub.s32 %s18, %s30
      %s32 = ssub.s32 %s19, %s26
      %s33 = sor.u32 %s31, %s32
      %p34 = scmp.eq.s32.totalorder %s33, 0
      %s36 = sadd.s32 %s35, 1
      %s37 = scalar_select %p34, %s35, %s36
      %p40 = pneg %p34
      %p41 = scmp.eq.s32.totalorder %s11, 7
      %p42 = por %p40, %p41
      %p43 = scmp.ne.s32.totalorder %s35, %s38
      %p44 = scmp.eq.s32.totalorder %s11, 0
      %p45 = por %p43, %p44
      %p46 = scmp.ne.s32.totalorder %s35, %s38
      %p47 = scmp.eq.s32.totalorder %s16, 7
      %p48 = por %p46, %p47
      %p49 = scmp.ne.s32.totalorder %s38, %s39
      %p50 = scmp.eq.s32.totalorder %s16, 0
      %p51 = por %p49, %p50
      %p52 = scmp.ne.s32.totalorder %s38, %s39
      %p53 = scmp.eq.s32.totalorder %s17, 7
      %p54 = por %p52, %p53
      %p56 = scmp.ne.s32.totalorder %s39, %s55
      %p57 = scmp.eq.s32.totalorder %s17, 0
      %p58 = por %p56, %p57
      %s59 = ssub.s32 %s18, %s30
      %s60 = ssub.s32 %s19, %s26
      %s61 = sor.u32 %s59, %s60
      %p62 = scmp.eq.s32.totalorder %s61, 0
      %s64 = sadd.s32 %s63, 1
      %s65 = scalar_select %p62, %s63, %s64
      %p68 = pneg %p62
      %p69 = scmp.eq.s32.totalorder %s11, 7
      %p70 = por %p68, %p69
      %p71 = scmp.ne.s32.totalorder %s63, %s66
      %p72 = scmp.eq.s32.totalorder %s11, 0
      %p73 = por %p71, %p72
      %p74 = scmp.ne.s32.totalorder %s63, %s66
      %p75 = scmp.eq.s32.totalorder %s16, 7
      %p76 = por %p74, %p75
      %p77 = scmp.ne.s32.totalorder %s66, %s67
      %p78 = scmp.eq.s32.totalorder %s16, 0
      %p79 = por %p77, %p78
      %p80 = scmp.ne.s32.totalorder %s66, %s67
      %p81 = scmp.eq.s32.totalorder %s17, 7
      %p82 = por %p80, %p81
      %p84 = scmp.ne.s32.totalorder %s67, %s83
      %p85 = scmp.eq.s32.totalorder %s17, 0
      %p86 = por %p84, %p85
      %s87 = ssub.s32 %s18, %s30
      %s88 = ssub.s32 %s19, %s26
      %s89 = sor.u32 %s87, %s88
      %p90 = scmp.eq.s32.totalorder %s89, 0
      %s92 = sadd.s32 %s91, 1
      %s93 = scalar_select %p90, %s91, %s92
      %p96 = pneg %p90
      %p97 = scmp.eq.s32.totalorder %s11, 7
      %p98 = por %p96, %p97
      %p99 = scmp.ne.s32.totalorder %s91, %s94
      %p100 = scmp.eq.s32.totalorder %s11, 0
      %p101 = por %p99, %p100
      %p102 = scmp.ne.s32.totalorder %s91, %s94
      %p103 = scmp.eq.s32.totalorder %s16, 7
      %p104 = por %p102, %p103
      %p105 = scmp.ne.s32.totalorder %s94, %s95
      %p106 = scmp.eq.s32.totalorder %s16, 0
      %p107 = por %p105, %p106
      %p108 = scmp.ne.s32.totalorder %s94, %s95
      %p109 = scmp.eq.s32.totalorder %s17, 7
      %p110 = por %p108, %p109
      %p112 = scmp.ne.s32.totalorder %s95, %s111
      %p113 = scmp.eq.s32.totalorder %s17, 0
      %p114 = por %p112, %p113
      %p115 = scmp.le.s32.totalorder 1, %s11
      %p116 = scmp.lt.s32.totalorder %s11, 9
      %p117 = pnand %p115, %p116
      %p118 = pneg %p117
      // Predicated region
      $region9: #{tpu_custom_call.1} parent=5 // pred_check
        _
      $region10: #{tpu_custom_call.1} parent=5 // pred_check_branch
        %120 = sbr.rel (%p117) target = $region12
      $region11: #{tpu_custom_call.1} parent=5 // pred_region
        %s121 = ssub.s32 %s11, 1
      $region12: #{tpu_custom_call.1} parent=5 // pred_fallthru
        _
      %p122 = scmp.lt.s32.totalorder %s11, 8
      // Predicated region
      $region13: #{tpu_custom_call.1} parent=5 // pred_check
        %p123 = pneg %p122
      $region14: #{tpu_custom_call.1} parent=5 // pred_check_branch
        %125 = sbr.rel (%p123) target = $region16
      $region15: #{tpu_custom_call.1} parent=5 // pred_region
        // Predicated region
        $region17: #{tpu_custom_call.1} parent=15 // pred_check
          %p126 = pneg %p45
        $region18: #{tpu_custom_call.1} parent=15 // pred_check_branch
          %128 = sbr.rel (%p126) target = $region20
        $region19: #{tpu_custom_call.1} parent=15 // pred_region
          %s129 = sand.u32 %s35, 1
          %s130 = sand.u32 %s35, 1
          %s131 = smul.addr %s130, 16
          %s132 = scalar_lea.vmem [#allocation2], %s131
          %s133 = smul.addr %s18, 8
          %s134 = sadd.s32 %s19, %s133
          %s135 = smul.addr %s134, 8
          %s136 = scalar_lea.vmem %s0, %s135
          // Predicated region
          $region21: #{tpu_custom_call.1} parent=19 // pred_check
            _
          $region22: #{tpu_custom_call.1} parent=19 // pred_check_branch
            %138 = sbr.rel (0) target = $region24
          $region23: #{tpu_custom_call.1} parent=19 // pred_region
            // Predicated region
            $region25: #{tpu_custom_call.1} parent=23 // pred_check
              _
            $region26: #{tpu_custom_call.1} parent=23 // pred_check_branch
              %140 = sbr.rel (0) target = $region28
            $region27: #{tpu_custom_call.1} parent=23 // pred_region
              // Predicated region
              $region40: #{tpu_custom_call.1} parent=27 // pred_check
                _
              $region41: #{tpu_custom_call.1} parent=27 // pred_check_branch
                %158 = sbr.rel (0) target = $region43
              $region42: #{tpu_custom_call.1} parent=27 // pred_region
                loop: start=0, step=1, limit=1
                $region44: #{tpu_custom_call.1} parent=42 // loop_pre_header
                  _
                $region45: #{tpu_custom_call.1} parent=42 // loop_header
                  %s160 = sphi 0, %s164
                  %p161 = scmp.ge.s32.totalorder %s160, 1
                  %s165 = sphi %s136, %s136
                  %s166 = sphi %s132, %s132
                $region46: #{tpu_custom_call.1} parent=42 // loop_header_branch
                  %163 = sbr.rel (%p161) target = $region50
                $region47: #{tpu_custom_call.1} parent=42 // loop_body
                  %v167 = vld [vmem:[%s165] sm:$0xff]
                  %168 = vst [vmem:[%s166] sm:$0xff] %v167
                  %v169 = vld [vmem:[%s165 + $0x20] sm:$0xff]
                  %170 = vst [vmem:[%s166 + $0x8] sm:$0xff] %v169
                $region48: #{tpu_custom_call.1} parent=42 // loop_footer
                  %s164 = sadd.s32 1, %s160
                $region49: #{tpu_custom_call.1} parent=42 // loop_footer_branch
                  %159 = sbr.rel target = $region45
                $region50: #{tpu_custom_call.1} parent=42 // loop_exit
                  _
              $region43: #{tpu_custom_call.1} parent=27 // pred_fallthru
                _
              // Predicated region
              $region51: #{tpu_custom_call.1} parent=27 // pred_check
                _
              $region52: #{tpu_custom_call.1} parent=27 // pred_check_branch
                %172 = sbr.rel target = $region54
              $region53: #{tpu_custom_call.1} parent=27 // pred_region
                _
              $region54: #{tpu_custom_call.1} parent=27 // pred_fallthru
                _
            $region28: #{tpu_custom_call.1} parent=23 // pred_fallthru
              _
            // Predicated region
            $region29: #{tpu_custom_call.1} parent=23 // pred_check
              _
            $region30: #{tpu_custom_call.1} parent=23 // pred_check_branch
              %142 = sbr.rel target = $region32
            $region31: #{tpu_custom_call.1} parent=23 // pred_region
              %s144 = ssub.s32 256, 1
              loop: start=0, step=1, limit=1
              $region33: #{tpu_custom_call.1} parent=31 // loop_pre_header
                _
              $region34: #{tpu_custom_call.1} parent=31 // loop_header
                %s146 = sphi 0, %s150
                %p147 = scmp.ge.s32.totalorder %s146, 1
                %s151 = sphi %s136, %s136
                %s152 = sphi %s132, %s132
              $region35: #{tpu_custom_call.1} parent=31 // loop_header_branch
                %149 = sbr.rel (%p147) target = $region39
              $region36: #{tpu_custom_call.1} parent=31 // loop_body
                %v153 = vld [vmem:[%s151] sm:%s144]
                %154 = vst [vmem:[%s152] sm:%s144] %v153
                %v155 = vld [vmem:[%s151 + $0x20] sm:%s144]
                %156 = vst [vmem:[%s152 + $0x8] sm:%s144] %v155
              $region37: #{tpu_custom_call.1} parent=31 // loop_footer
                %s150 = sadd.s32 1, %s146
              $region38: #{tpu_custom_call.1} parent=31 // loop_footer_branch
                %145 = sbr.rel target = $region34
              $region39: #{tpu_custom_call.1} parent=31 // loop_exit
                _
            $region32: #{tpu_custom_call.1} parent=23 // pred_fallthru
              _
          $region24: #{tpu_custom_call.1} parent=19 // pred_fallthru
            _
          %173 = vnop
        $region20: #{tpu_custom_call.1} parent=15 // pred_fallthru
          _
        // Predicated region
        $region55: #{tpu_custom_call.1} parent=15 // pred_check
          %p174 = pneg %p73
        $region56: #{tpu_custom_call.1} parent=15 // pred_check_branch
          %176 = sbr.rel (%p174) target = $region58
        $region57: #{tpu_custom_call.1} parent=15 // pred_region
          %p177 = scmp.lt.s32.totalorder %s18, 1
          %s178 = scalar_select %p177, %s18, 1
          %p179 = scmp.lt.s32.totalorder %s19, 3
          %s180 = scalar_select %p179, %s19, 3
          %s181 = smul.addr %s178, 4
          %s182 = sadd.s32 %s180, %s181
          %s183 = scalar_lea.vmem %s1, %s182
        $region58: #{tpu_custom_call.1} parent=15 // pred_fallthru
          _
      $region16: #{tpu_custom_call.1} parent=5 // pred_fallthru
        _
      %p184 = scmp.le.s32.totalorder 1, %s11
      %p185 = scmp.lt.s32.totalorder %s11, 9
      %p186 = pnand %p184, %p185
      %p187 = pneg %p186
      // Predicated region
      $region59: #{tpu_custom_call.1} parent=5 // pred_check
        _
      $region60: #{tpu_custom_call.1} parent=5 // pred_check_branch
        %189 = sbr.rel (%p186) target = $region62
      $region61: #{tpu_custom_call.1} parent=5 // pred_region
        %s190 = ssub.s32 %s11, 1
        %s191 = sand.u32 %s38, 1
        %s192 = sand.u32 %s38, 1
        %s193 = smul.addr %s192, 16
        %s194 = scalar_lea.vmem [#allocation2], %s193
        // Predicated region
        $region63: #{tpu_custom_call.1} parent=61 // pred_check
          %p195 = pneg %p51
        $region64: #{tpu_custom_call.1} parent=61 // pred_check_branch
          %197 = sbr.rel (%p195) target = $region66
        $region65: #{tpu_custom_call.1} parent=61 // pred_region
          _
        $region66: #{tpu_custom_call.1} parent=61 // pred_fallthru
          _
        %s198 = sand.u32 %s38, 1
        %s199 = sand.u32 %s38, 1
        %s200 = smul.addr %s199, 16
        %s201 = scalar_lea.vmem [#allocation2], %s200
        %p202 = pneg %p51
        %p203 = pneg %p48
        %p204 = scmp.lt.s32.totalorder %s20, 1
        %s205 = scalar_select %p204, %s20, 1
        %p206 = scmp.lt.s32.totalorder %s21, 3
        %s207 = scalar_select %p206, %s21, 3
        %s208 = smul.addr %s205, 4
        %s209 = sadd.s32 %s207, %s208
        %s210 = scalar_lea.vmem %s1, %s209
        %p211 = pneg %p79
        %p212 = pneg %p76
        %p213 = pneg %p107
        %p214 = pneg %p104
        %s215 = sand.u32 %s94, 1
        %s216 = scalar_lea.sflag [#allocation4], %s215
        %s217 = sand.u32 %s94, 1
        %s218 = smul.addr %s217, 8
        %s219 = scalar_lea.vmem [#allocation3], %s218
        %p220 = scmp.lt.s32.totalorder %s20, 1
        %s221 = scalar_select %p220, %s20, 1
        %p222 = scmp.lt.s32.totalorder %s21, 3
        %s223 = scalar_select %p222, %s21, 3
        %s224 = smul.addr %s221, 4
        %s225 = sadd.s32 %s223, %s224
        %s226 = scalar_lea.vmem %s1, %s225
        %v227 = vld [vmem:[%s194] sm:$0xff]
        %v228 = vld [vmem:[%s194 + $0x8] sm:$0x3f]
        %v229 = vld [vmem:[%s226] sm:$0x1]
        %vm230 = vcmask 1045504
        %v231 = vsel %vm230, %v228, -inf
        %v232 = vmax.f32 %v227, %v231
        %v233 = vrot.slane %v232, 4
        %v234 = vmax.f32 %v232, %v233
        %v235 = vrot.slane %v234, 2
        %v236 = vmax.f32 %v234, %v235
        %v237 = vrot.slane %v236, 1
        %v238 = vmax.f32 %v236, %v237
        %v239 = vsub.f32 %v227, %v238
        %v240 = vsub.f32 %v228, %v238
        %v241 = vmul.f32 %v239, 1.442695
        %v242 = vpow.pop %v241
        %v243 = vmul.f32 %v240, 1.442695
        %v244 = vpow.pop %v243
        %v245 = vsel %vm230, %v244, 0.0
        %v246 = vadd.f32 %v242, %v245
        %v247 = vrot.slane %v246, 4
        %v248 = vadd.f32 %v246, %v247
        %v249 = vrot.slane %v248, 2
        %v250 = vadd.f32 %v248, %v249
        %v251 = vrot.slane %v250, 1
        %v252 = vadd.f32 %v250, %v251
        %v253 = vlog2.pop %v252
        %v254 = vmul.f32 %v253, 0.6931472
        %v255 = vlaneseq
        %v256 = vshrl.u32 %v255, 7
        %v257 = vadd.s32 %v256, 8
        %v258 = vperm.slane %v229, 0
        %vm259 = vcmp.eq.s32.totalorder %v256, %v258
        %vm260 = vcmp.eq.s32.totalorder %v257, %v258
        %vm261 = vcmp.eq.s32.totalorder %v256, 0
        %vm262 = vcmp.eq.s32.totalorder %v257, 0
        %v263 = vsel %vm261, 1.0, 0.0
        %v264 = vsel %vm262, 1.0, 0.0
        %vm265 = vcmp.eq.s32.totalorder %v256, 1
        %vm266 = vcmp.eq.s32.totalorder %v257, 1
        %v267 = vsel %vm265, 3.522, %v263
        %v268 = vsel %vm266, 3.522, %v264
        %vm269 = vcmp.eq.s32.totalorder %v256, 2
        %vm270 = vcmp.eq.s32.totalorder %v257, 2
        %v271 = vsel %vm269, 6.1049, %v267
        %v272 = vsel %vm270, 6.1049, %v268
        %vm273 = vcmp.eq.s32.totalorder %v256, 3
        %vm274 = vcmp.eq.s32.totalorder %v257, 3
        %v275 = vsel %vm273, 4.6267, %v271
        %v276 = vsel %vm274, 4.6267, %v272
        %vm277 = vcmp.eq.s32.totalorder %v256, 4
        %vm278 = vcmp.eq.s32.totalorder %v257, 4
        %v279 = vsel %vm277, 20.8959, %v275
        %v280 = vsel %vm278, 20.8959, %v276
        %vm281 = vcmp.eq.s32.totalorder %v256, 5
        %vm282 = vcmp.eq.s32.totalorder %v257, 5
        %v283 = vsel %vm281, 29.9953, %v279
        %v284 = vsel %vm282, 29.9953, %v280
        %vm285 = vcmp.eq.s32.totalorder %v256, 6
        %vm286 = vcmp.eq.s32.totalorder %v257, 6
        %v287 = vsel %vm285, 1.0, %v283
        %v288 = vsel %vm286, 1.0, %v284
        %vm289 = vcmp.eq.s32.totalorder %v256, 7
        %vm290 = vcmp.eq.s32.totalorder %v257, 7
        %v291 = vsel %vm289, 3.1058, %v287
        %v292 = vsel %vm290, 3.1058, %v288
        %vm293 = vcmp.eq.s32.totalorder %v256, 8
        %vm294 = vcmp.eq.s32.totalorder %v257, 8
        %v295 = vsel %vm293, 9.3213, %v291
        %v296 = vsel %vm294, 9.3213, %v292
        %vm297 = vcmp.eq.s32.totalorder %v256, 9
        %vm298 = vcmp.eq.s32.totalorder %v257, 9
        %v299 = vsel %vm297, 8.8012, %v295
        %v300 = vsel %vm298, 8.8012, %v296
        %vm301 = vcmp.eq.s32.totalorder %v256, 10
        %vm302 = vcmp.eq.s32.totalorder %v257, 10
        %v303 = vsel %vm301, 13.2363, %v299
        %v304 = vsel %vm302, 13.2363, %v300
        %vm305 = vcmp.eq.s32.totalorder %v256, 11
        %vm306 = vcmp.eq.s32.totalorder %v257, 11
        %v307 = vsel %vm305, 11.6498, %v303
        %v308 = vsel %vm306, 11.6498, %v304
        %vm309 = vcmp.eq.s32.totalorder %v256, 12
        %vm310 = vcmp.eq.s32.totalorder %v257, 12
        %v311 = vsel %vm309, 1.0, %v307
        %v312 = vsel %vm310, 1.0, %v308
        %vm313 = vcmp.eq.s32.totalorder %v256, 13
        %vm314 = vcmp.eq.s32.totalorder %v257, 13
        %v315 = vsel %vm313, 1.0, %v311
        %v316 = vsel %vm314, 1.0, %v312
        %v317 = vsel %vm259, %v239, 0.0
        %v318 = vsel %vm260, %v240, 0.0
        %v319 = vsel %vm230, %v318, 0.0
        %v320 = vadd.f32 %v317, %v319
        %v321 = vrot.slane %v320, 4
        %v322 = vadd.f32 %v320, %v321
        %v323 = vrot.slane %v322, 2
        %v324 = vadd.f32 %v322, %v323
        %v325 = vrot.slane %v324, 1
        %v326 = vadd.f32 %v324, %v325
        %v327 = vsel %vm259, %v315, 0.0
        %v328 = vsel %vm260, %v316, 0.0
        %v329 = vsel %vm230, %v328, 0.0
        %v330 = vadd.f32 %v327, %v329
        %v331 = vrot.slane %v330, 4
        %v332 = vadd.f32 %v330, %v331
        %v333 = vrot.slane %v332, 2
        %v334 = vadd.f32 %v332, %v333
        %v335 = vrot.slane %v334, 1
        %v336 = vadd.f32 %v334, %v335
        %v337 = vsub.f32 %v254, %v326
        %v338 = vmul.f32 %v336, %v337
        %vm339 = vcmask 1040384
        %v340 = vsel %vm339, %v338, 0.0
        %341 = vadd.xlane.f32.xlu0 %v340
        %v342 = vpop.xlane.xlu0 %341
        %v343 = vrot.slane %v342, 4
        %v344 = vadd.f32 %v342, %v343
        %v345 = vrot.slane %v344, 2
        %v346 = vadd.f32 %v344, %v345
        %v347 = vrot.slane %v346, 1
        %v348 = vadd.f32 %v346, %v347
        %s349 = vtos %v348
        %v350 = vsel %vm339, %v336, 0.0
        %351 = vadd.xlane.f32.xlu0 %v350
        %v352 = vpop.xlane.xlu0 %351
        %v353 = vrot.slane %v352, 4
        %v354 = vadd.f32 %v352, %v353
        %v355 = vrot.slane %v354, 2
        %v356 = vadd.f32 %v354, %v355
        %v357 = vrot.slane %v356, 1
        %v358 = vadd.f32 %v356, %v357
        %s359 = vtos %v358
        %v360 = vstv %s359
        %v361 = vsel %vm265, %v360, 0.0
        %v362 = vstv %s349
        %v363 = vsel %vm261, %v362, %v361
        %364 = vst [vmem:[%s219] sm:$0xff] %v363
        %s365 = sand.u32 %s94, 1
        %s366 = scalar_lea.sflag [#allocation4], %s365
        %s367 = sand.u32 %s94, 1
        %s368 = smul.addr %s367, 8
        %s369 = scalar_lea.vmem [#allocation3], %s368
        // Predicated region
        $region67: #{tpu_custom_call.1} parent=61 // pred_check
          %p370 = pneg %p104
        $region68: #{tpu_custom_call.1} parent=61 // pred_check_branch
          %372 = sbr.rel (%p370) target = $region70
        $region69: #{tpu_custom_call.1} parent=61 // pred_region
          %374 = vsyncadd %s366, 0
          %s375 = smul.addr %s20, 4
          %s376 = sadd.s32 %s21, %s375
          %s377 = smul.addr %s376, 8
          %s378 = scalar_lea.hbm %s2, %s377
          %s380 = sshll.u32 %s369, 4
          %s381 = int_to_ptr.vmem [resolvable:$true] %s380
          %s382 = sshll.u32 %s378, 4
          %s383 = int_to_ptr.hbm [resolvable:$true] %s382
          %385 = dma.vmem_to_hbm [thread:$0]  %s381, 128, %s383, %s366
        $region70: #{tpu_custom_call.1} parent=61 // pred_fallthru
          _
      $region62: #{tpu_custom_call.1} parent=5 // pred_fallthru
        _
      %p386 = scmp.le.s32.totalorder 2, %s11
      // Predicated region
      $region71: #{tpu_custom_call.1} parent=5 // pred_check
        %p387 = pneg %p386
      $region72: #{tpu_custom_call.1} parent=5 // pred_check_branch
        %389 = sbr.rel (%p387) target = $region74
      $region73: #{tpu_custom_call.1} parent=5 // pred_region
        %s390 = ssub.s32 %s11, 2
        // Predicated region
        $region75: #{tpu_custom_call.1} parent=73 // pred_check
          %p391 = pneg %p110
        $region76: #{tpu_custom_call.1} parent=73 // pred_check_branch
          %393 = sbr.rel (%p391) target = $region78
        $region77: #{tpu_custom_call.1} parent=73 // pred_region
          %s394 = sand.u32 %s95, 1
          %s395 = scalar_lea.sflag [#allocation4], %s394
          %s396 = sand.u32 %s95, 1
          %s397 = smul.addr %s396, 8
          %s398 = scalar_lea.vmem [#allocation3], %s397
          %400 = dma.done %s395, 128
        $region78: #{tpu_custom_call.1} parent=73 // pred_fallthru
          _
      $region74: #{tpu_custom_call.1} parent=5 // pred_fallthru
        _
    $region6: #{tpu_custom_call.1} parent=1 // loop_footer
      %s15 = sadd.s32 1, %s11
    $region7: #{tpu_custom_call.1} parent=1 // loop_footer_branch
      %10 = sbr.rel target = $region3
    $region8: #{tpu_custom_call.1} parent=1 // loop_exit
      _
    %401 = vsyncpa [#allocation4], 1
    %s402 = scalar_lea.sflag [#allocation4], 1
    %403 = vsyncpa %s402, 1

</llo_original>
